<compile_context>
chip_gen: v5e
topology: v5e:2x2
jax: 0.10.0
libtpu: 0.0.40
codegen_flags: <defaults>
</compile_context>

<pallas_src>
import jax
import jax.numpy as jnp
from jax.experimental import pallas as pl
from jax.experimental.pallas import tpu as pltpu


def _ae_loss_kernel(g_ref, m_ref, out_ref):
    # g_ref: (5, B, K) f32 gathered tag embeddings (VMEM)
    # m_ref: (B, K) int8 keypoint mask in {0, 1}     (VMEM)
    # out_ref: (2,) f32 SMEM -> [pull, push]
    g = g_ref[...]                                            # (5, B, K) f32
    m = m_ref[...].astype(jnp.float32)                        # (B, K)

    num = jnp.sum(m, axis=1, keepdims=True)                   # (B, 1)
    inv = 1.0 / (num + 1e-4)                                  # exact, O(B)
    inv2 = 1.0 / ((num - 1.0) * num + 1e-4)                   # exact, O(B)

    tag_mean = jnp.sum(g, axis=0) * 0.2                       # (B, K)

    # pull = sum_i sum_{b,k} mask[b,k] * (g_i[b,k] - mean[b,k])^2 / (num_b + eps)
    sq = jnp.sum(jnp.square(g - tag_mean[None, :, :]), axis=0)   # (B, K)
    out_ref[0] = jnp.sum(m * sq * inv)

    # push: pairwise over keypoints; diagonal included (matches mask.eq(2)).
    dist = tag_mean[:, None, :] - tag_mean[:, :, None]        # (B,K,K): tm[b,j]-tm[b,i]
    val = jnp.maximum(1.0 - jnp.abs(dist), 0.0) - inv[:, :, None]
    # Row mask factored out of the K^2 region (no (B,K,K) pair temporary).
    per_row = m * jnp.sum(m[:, None, :] * val, axis=2)        # (B, K)
    out_ref[1] = jnp.sum(per_row * inv2)


@jax.jit
def ae_loss_pallas(tag1, tag2, tag3, tag4, tag5,
                   ind1, ind2, ind3, ind4, ind5, mask):
    B, C, H, W = tag1.shape
    assert C == 1, "AE tag maps have a single embedding channel"
    HW = H * W

    # _transpose_and_gather_feat, hoisted: gather each tag map individually
    # (indices assumed in-range [0, H*W), as torch.gather requires) and stack
    # only the tiny (B, K) results.
    gathered = [
        jnp.take_along_axis(t.reshape(B, HW), i.astype(jnp.int32), axis=1)
        for t, i in zip((tag1, tag2, tag3, tag4, tag5),
                        (ind1, ind2, ind3, ind4, ind5))
    ]
    g = jnp.stack(gathered, axis=0).astype(jnp.float32)       # (5, B, K)
    m8 = mask.astype(jnp.int8)                                # (B, K), 1 B/elem

    vmem = pltpu.MemorySpace.VMEM
    smem = pltpu.MemorySpace.SMEM
    out = pl.pallas_call(
        _ae_loss_kernel,
        out_shape=jax.ShapeDtypeStruct((2,), jnp.float32),
        in_specs=[pl.BlockSpec(memory_space=vmem),
                  pl.BlockSpec(memory_space=vmem)],
        out_specs=pl.BlockSpec(memory_space=smem),
    )(g, m8)
    return out[0], out[1]


def ae_loss_ref(tag1, tag2, tag3, tag4, tag5,
                ind1, ind2, ind3, ind4, ind5, mask):
    """Pure-JAX mirror of the PyTorch forward (for validation)."""
    def gather(t, ind):
        B, C, H, W = t.shape
        feat = jnp.transpose(t, (0, 2, 3, 1)).reshape(B, H * W, C)
        g = jnp.take_along_axis(feat, ind[:, :, None].astype(jnp.int32), axis=1)
        return g[..., 0]                                      # [B, K]

    g = [gather(t, i) for t, i in zip((tag1, tag2, tag3, tag4, tag5),
                                      (ind1, ind2, ind3, ind4, ind5))]
    m = mask.astype(jnp.float32)
    num = jnp.sum(m, axis=1, keepdims=True)                   # [B, 1]
    tm = sum(g) / 5.0                                         # [B, K]

    pull = sum(jnp.sum(m * jnp.square(gi - tm) / (num + 1e-4)) for gi in g)

    pairm = m[:, :, None] * m[:, None, :]                     # m[b,i]*m[b,j]
    numb = num[:, :, None]                                    # [B, 1, 1]
    num2 = (numb - 1.0) * numb
    dist = tm[:, None, :] - tm[:, :, None]                    # tm[b,j] - tm[b,i]
    dist = jnp.maximum(1.0 - jnp.abs(dist), 0.0) - 1.0 / (numb + 1e-4)
    dist = dist / (num2 + 1e-4)
    push = jnp.sum(pairm * dist)
    return pull, push


if __name__ == "__main__":
    B, C, H, W, K = 2, 1, 16, 16, 8
    key = jax.random.PRNGKey(0)
    keys = jax.random.split(key, 11)

    tags = [0.5 * jax.random.normal(keys[i], (B, C, H, W), jnp.float32)
            for i in range(5)]
    inds = [jax.random.randint(keys[5 + i], (B, K), 0, H * W, dtype=jnp.int32)
            for i in range(5)]
    mask = jax.random.uniform(keys[10], (B, K)) < 0.7   # bool keypoint mask
    mask = mask.at[:, :2].set(True)                     # >= 2 valid keypoints/image

    pull, push = ae_loss_pallas(*tags, *inds, mask)
    jax.block_until_ready((pull, push))

    pull_r, push_r = ae_loss_ref(*tags, *inds, mask)
    assert jnp.allclose(pull, pull_r, rtol=1e-4, atol=1e-4), (pull, pull_r)
    assert jnp.allclose(push, push_r, rtol=1e-4, atol=1e-4), (push, push_r)

    print("KERNEL_OK")
</pallas_src>

<mosaic_0001>
module attributes {stable_mosaic.version = 11 : i64} {
  func.func @_ae_loss_kernel(%arg0: memref<5x2x8xf32, #tpu.memory_space<vmem>>, %arg1: memref<2x8xi8, #tpu.memory_space<vmem>>, %arg2: memref<2xf32, #tpu.memory_space<smem>>) attributes {dimension_semantics = [], scalar_prefetch = 0 : i64, scratch_operands = 0 : i64, tpu.core_type = #tpu.core_type<tc>} {
    %c0 = arith.constant 0 : index
    %c0_0 = arith.constant 0 : index
    %c0_1 = arith.constant 0 : index
    %0 = vector.load %arg0[%c0, %c0_0, %c0_1] : memref<5x2x8xf32, #tpu.memory_space<vmem>>, vector<5x2x8xf32>
    %c0_2 = arith.constant 0 : index
    %c0_3 = arith.constant 0 : index
    %1 = vector.load %arg1[%c0_2, %c0_3] : memref<2x8xi8, #tpu.memory_space<vmem>>, vector<2x8xi8>
    %2 = arith.sitofp %1 : vector<2x8xi8> to vector<2x8xf32>
    %cst = arith.constant dense<0.000000e+00> : vector<2xf32>
    %3 = vector.multi_reduction <add>, %2, %cst [1] : vector<2x8xf32> to vector<2xf32>
    %4 = vector.shape_cast %3 : vector<2xf32> to vector<2x1xf32>
    %cst_4 = arith.constant 9.99999974E-5 : f32
    %5 = vector.broadcast %cst_4 : f32 to vector<2x1xf32>
    %6 = arith.addf %4, %5 : vector<2x1xf32>
    %cst_5 = arith.constant 1.000000e+00 : f32
    %7 = vector.broadcast %cst_5 : f32 to vector<2x1xf32>
    %8 = arith.divf %7, %6 : vector<2x1xf32>
    %cst_6 = arith.constant 1.000000e+00 : f32
    %9 = vector.broadcast %cst_6 : f32 to vector<2x1xf32>
    %10 = arith.subf %4, %9 : vector<2x1xf32>
    %11 = arith.mulf %10, %4 : vector<2x1xf32>
    %cst_7 = arith.constant 9.99999974E-5 : f32
    %12 = vector.broadcast %cst_7 : f32 to vector<2x1xf32>
    %13 = arith.addf %11, %12 : vector<2x1xf32>
    %cst_8 = arith.constant 1.000000e+00 : f32
    %14 = vector.broadcast %cst_8 : f32 to vector<2x1xf32>
    %15 = arith.divf %14, %13 : vector<2x1xf32>
    %cst_9 = arith.constant dense<0.000000e+00> : vector<2x8xf32>
    %16 = vector.multi_reduction <add>, %0, %cst_9 [0] : vector<5x2x8xf32> to vector<2x8xf32>
    %cst_10 = arith.constant 2.000000e-01 : f32
    %17 = vector.broadcast %cst_10 : f32 to vector<2x8xf32>
    %18 = arith.mulf %16, %17 : vector<2x8xf32>
    %19 = vector.shape_cast %18 : vector<2x8xf32> to vector<1x2x8xf32>
    %20 = vector.broadcast %19 : vector<1x2x8xf32> to vector<5x2x8xf32>
    %21 = arith.subf %0, %20 : vector<5x2x8xf32>
    %22 = arith.mulf %21, %21 : vector<5x2x8xf32>
    %cst_11 = arith.constant dense<0.000000e+00> : vector<2x8xf32>
    %23 = vector.multi_reduction <add>, %22, %cst_11 [0] : vector<5x2x8xf32> to vector<2x8xf32>
    %24 = arith.mulf %2, %23 : vector<2x8xf32>
    %25 = vector.broadcast %8 : vector<2x1xf32> to vector<2x8xf32>
    %26 = arith.mulf %24, %25 : vector<2x8xf32>
    %27 = vector.shape_cast %26 : vector<2x8xf32> to vector<1x2x8xf32>
    %cst_12 = arith.constant dense<0.000000e+00> : vector<1xf32>
    %28 = vector.multi_reduction <add>, %27, %cst_12 [1, 2] : vector<1x2x8xf32> to vector<1xf32>
    %29 = vector.shape_cast %28 : vector<1xf32> to vector<1x1x1xf32>
    %30 = vector.extract %29[0, 0, 0] : f32 from vector<1x1x1xf32>
    %c0_13 = arith.constant 0 : index
    %31 = memref.load %arg2[%c0_13] : memref<2xf32, #tpu.memory_space<smem>>
    memref.store %30, %arg2[%c0_13] : memref<2xf32, #tpu.memory_space<smem>>
    %32 = vector.shape_cast %18 : vector<2x8xf32> to vector<2x1x8xf32>
    %33 = vector.shape_cast %18 : vector<2x8xf32> to vector<2x8x1xf32>
    %34 = vector.broadcast %32 : vector<2x1x8xf32> to vector<2x8x8xf32>
    %35 = vector.broadcast %33 : vector<2x8x1xf32> to vector<2x8x8xf32>
    %36 = arith.subf %34, %35 : vector<2x8x8xf32>
    %37 = math.absf %36 : vector<2x8x8xf32>
    %cst_14 = arith.constant 1.000000e+00 : f32
    %38 = vector.broadcast %cst_14 : f32 to vector<2x8x8xf32>
    %39 = arith.subf %38, %37 : vector<2x8x8xf32>
    %cst_15 = arith.constant 0.000000e+00 : f32
    %40 = vector.broadcast %cst_15 : f32 to vector<2x8x8xf32>
    %41 = arith.maximumf %39, %40 : vector<2x8x8xf32>
    %42 = vector.shape_cast %8 : vector<2x1xf32> to vector<2x1x1xf32>
    %43 = vector.broadcast %42 : vector<2x1x1xf32> to vector<2x8x8xf32>
    %44 = arith.subf %41, %43 : vector<2x8x8xf32>
    %45 = vector.shape_cast %2 : vector<2x8xf32> to vector<2x1x8xf32>
    %46 = vector.broadcast %45 : vector<2x1x8xf32> to vector<2x8x8xf32>
    %47 = arith.mulf %46, %44 : vector<2x8x8xf32>
    %cst_16 = arith.constant dense<0.000000e+00> : vector<2x8xf32>
    %48 = vector.multi_reduction <add>, %47, %cst_16 [2] : vector<2x8x8xf32> to vector<2x8xf32>
    %49 = arith.mulf %2, %48 : vector<2x8xf32>
    %50 = vector.broadcast %15 : vector<2x1xf32> to vector<2x8xf32>
    %51 = arith.mulf %49, %50 : vector<2x8xf32>
    %52 = vector.shape_cast %51 : vector<2x8xf32> to vector<1x2x8xf32>
    %cst_17 = arith.constant dense<0.000000e+00> : vector<1xf32>
    %53 = vector.multi_reduction <add>, %52, %cst_17 [1, 2] : vector<1x2x8xf32> to vector<1xf32>
    %54 = vector.shape_cast %53 : vector<1xf32> to vector<1x1x1xf32>
    %55 = vector.extract %54[0, 0, 0] : f32 from vector<1x1x1xf32>
    %c1 = arith.constant 1 : index
    %56 = memref.load %arg2[%c1] : memref<2xf32, #tpu.memory_space<smem>>
    memref.store %55, %arg2[%c1] : memref<2xf32, #tpu.memory_space<smem>>
    return
  }
}

</mosaic_0001>

<llo_original>
// kernel: ae_loss_pallas.1
$region0: #{ae_loss_pallas.1}
  #allocation0 [shape = 'u32[]', space=smem, size = 0x4, offset = 0x4, fixed_abs, tag = 'smem constant byte address 0x4 - core index']
  #allocation1 [shape = 'u32[72,128]{1,0:T(1,128)}', space=vmem, size = 0x9000, scoped, tag = 'internal scratch']
  %s0 = inlined_call_operand.vmem [shape: f32[5,2,8], index: 0, kind: input, shape index: {}]
  %s1 = inlined_call_operand.vmem [shape: s8[2,8], index: 1, kind: input, shape index: {}]
  %s2 = inlined_call_operand.vmem [shape: f32[2], index: 2, kind: output, shape index: {}]
  %s3 = sld [smem:[#allocation0]]
  $region18: #{ae_loss_pallas.1} parent=0
    _
  %s5 = ssub.s32 1, %s3
  %s6 = scalar_select 0, %s5, %s3
  $region1: #{ae_loss_pallas.1} parent=0
    #allocation2 [shape = 'u8[512]{0}', space=smem, size = 0x200, scoped, tag = 'output window, operand 0, single buffered']
    #allocation3 [shape = 's32[1]{0}', space=sflag, size = 0x4, scoped, tag = 'scoped memory for ae_loss_pallas.1']
    %7 = vsyncpa [#allocation3], 0
    // Predicated region
    $region2: #{ae_loss_pallas.1} parent=1 // pred_check
      _
    $region3: #{ae_loss_pallas.1} parent=1 // pred_check_branch
      %9 = sbr.rel (0) target = $region5
    $region4: #{ae_loss_pallas.1} parent=1 // pred_region
      _
    $region5: #{ae_loss_pallas.1} parent=1 // pred_fallthru
      _
    // Predicated region
    $region6: #{ae_loss_pallas.1} parent=1 // pred_check
      _
    $region7: #{ae_loss_pallas.1} parent=1 // pred_check_branch
      %11 = sbr.rel (0) target = $region9
    $region8: #{ae_loss_pallas.1} parent=1 // pred_region
      _
    $region9: #{ae_loss_pallas.1} parent=1 // pred_fallthru
      _
    %v12 = vld [vmem:[%s0] sm:$0x3]
    %v13 = vld [vmem:[%s0 + $0x2] sm:$0x3]
    %v14 = vld [vmem:[%s0 + $0x4] sm:$0x3]
    %v15 = vld [vmem:[%s0 + $0x6] sm:$0x3]
    %v16 = vld [vmem:[%s0 + $0x8] sm:$0x3]
    %v17 = vld [vmem:[%s1] sm:$0x1]
    %v18 = vunpack.c.0.s8 %v17
    %v19 = vcvt.s32.f32 %v18
    %vm20 = vcmask 58368
    %v21 = vsel %vm20, %v19, 0.0
    %22 = vadd.xlane.f32.xlu0 %v21
    %v23 = vpop.xlane.xlu0 %22
    %v24 = vadd.f32 %v23, 0.0001
    %v25 = vrcp.pop %v24
    %v26 = vmul.f32 %v24, %v25
    %v27 = vsub.f32 1.0, %v26
    %v28 = vmul.f32 %v25, %v27
    %v29 = vadd.f32 %v25, %v28
    %vm30 = vweird.f32 %v24
    %vm31 = vweird.f32 %v25
    %vm32 = vmor %vm30, %vm31
    %v33 = vsel %vm32, %v25, %v29
    %v34 = vand.u32 2147483647, %v24
    %vm35 = vcmp.eq.f32.partialorder %v34, 8.507059e+37
    %v36 = vand.u32 %v24, 2147483648
    %v37 = vor.u32 1.1754944e-38, %v36
    %v38 = vsel %vm35, %v37, %v33
    %v39 = vmul.f32 1.0, %v38
    %v40 = vsub.f32 %v23, 1.0
    %v41 = vmul.f32 %v40, %v23
    %v42 = vadd.f32 %v41, 0.0001
    %v43 = vrcp.pop %v42
    %v44 = vmul.f32 %v42, %v43
    %v45 = vsub.f32 1.0, %v44
    %v46 = vmul.f32 %v43, %v45
    %v47 = vadd.f32 %v43, %v46
    %vm48 = vweird.f32 %v42
    %vm49 = vweird.f32 %v43
    %vm50 = vmor %vm48, %vm49
    %v51 = vsel %vm50, %v43, %v47
    %v52 = vand.u32 2147483647, %v42
    %vm53 = vcmp.eq.f32.partialorder %v52, 8.507059e+37
    %v54 = vand.u32 %v42, 2147483648
    %v55 = vor.u32 1.1754944e-38, %v54
    %v56 = vsel %vm53, %v55, %v51
    %v57 = vmul.f32 1.0, %v56
    %v58 = vsel %vm20, %v12, 0.0
    %v59 = vsel %vm20, %v13, 0.0
    %v60 = vadd.f32 %v58, %v59
    %v61 = vsel %vm20, %v14, 0.0
    %v62 = vadd.f32 %v60, %v61
    %v63 = vsel %vm20, %v15, 0.0
    %v64 = vadd.f32 %v62, %v63
    %v65 = vsel %vm20, %v16, 0.0
    %v66 = vadd.f32 %v64, %v65
    %v67 = vmul.f32 %v66, 0.2
    %v68 = vsub.f32 %v12, %v67
    %v69 = vsub.f32 %v13, %v67
    %v70 = vsub.f32 %v14, %v67
    %v71 = vsub.f32 %v15, %v67
    %v72 = vsub.f32 %v16, %v67
    %v73 = vmul.f32 %v68, %v68
    %v74 = vmul.f32 %v69, %v69
    %v75 = vmul.f32 %v70, %v70
    %v76 = vmul.f32 %v71, %v71
    %v77 = vmul.f32 %v72, %v72
    %v78 = vsel %vm20, %v73, 0.0
    %v79 = vsel %vm20, %v74, 0.0
    %v80 = vadd.f32 %v78, %v79
    %v81 = vsel %vm20, %v75, 0.0
    %v82 = vadd.f32 %v80, %v81
    %v83 = vsel %vm20, %v76, 0.0
    %v84 = vadd.f32 %v82, %v83
    %v85 = vsel %vm20, %v77, 0.0
    %v86 = vadd.f32 %v84, %v85
    %v87 = vmul.f32 %v19, %v86
    %v88 = vmul.f32 %v87, %v39
    %v89 = vsel %vm20, %v88, 0.0
    %90 = vadd.xlane.f32.xlu0 %v89
    %v91 = vpop.xlane.xlu0 %90
    %v92 = vrot.slane %v91, 4
    %v93 = vadd.f32 %v91, %v92
    %v94 = vrot.slane %v93, 2
    %v95 = vadd.f32 %v93, %v94
    %v96 = vrot.slane %v95, 1
    %v97 = vadd.f32 %v95, %v96
    %s98 = vtos %v97
    %s99 = scalar_lea.smem [#allocation2], 0
    %100 = sst [smem:[%s99]] %s98
    %v102 = vrot.slane %v67, 1
    %v103 = vperm.slane %v67, 0
    %v104 = vlaneseq
    %v105 = vshrl.u32 %v104, 7
    %107 = vset.pattern.permute.xlu0 %v105
    %108 = vperm.xlu0 %107, %v103
    %v109 = vpop.permute.xlu0 %108
    %v110 = vperm.slane %v67, 1
    %v111 = vlaneseq
    %v112 = vshrl.u32 %v111, 7
    %114 = vset.pattern.permute.xlu0 %v112
    %115 = vperm.xlu0 %114, %v110
    %v116 = vpop.permute.xlu0 %115
    %v117 = vperm.slane %v67, 0
    %v118 = vperm.slane %v102, 0
    %v121 = vsub.f32 %v117, %v109
    %v122 = vsub.f32 %v118, %v116
    %v123 = vand.u32 2147483647, %v121
    %v124 = vand.u32 2147483647, %v122
    %v125 = vsub.f32 1.0, %v123
    %v126 = vsub.f32 1.0, %v124
    %v127 = vmax.f32 %v125, 0.0
    %v128 = vmax.f32 %v126, 0.0
    %v130 = vperm.slane %v39, 0
    %v131 = vperm.slane %v39, 1
    %v134 = vsub.f32 %v127, %v130
    %v135 = vsub.f32 %v128, %v131
    %v137 = vrot.slane %v19, 3
    %vm138 = vcmask 1040384
    %v139 = vsel %vm138, %v19, %v137
    %vm140 = vcmask 1041409
    %v141 = vsel %vm140, %v19, %v137
    %v142 = vrot.slane %v141, 1
    %v143 = vperm.slane %v139, 0
    %v144 = vperm.slane %v142, 0
    %v147 = vmul.f32 %v143, %v134
    %v148 = vmul.f32 %v144, %v135
    %vm149 = vcmask 64512
    %v150 = vsel %vm149, %v147, 0.0
    %151 = vadd.xlane.f32.xlu0 %v150
    %v152 = vpop.xlane.xlu0 %151
    %v153 = vsel %vm149, %v148, 0.0
    %154 = vadd.xlane.f32.xlu0 %v153
    %v155 = vpop.xlane.xlu0 %154
    %v159 = vunpack.c.l.s4 839922192
    %v160 = vunpack.c.0.s8 %v159
    %v161 = vperm.slane %v152, %v160
    %v163 = vunpack.c.l.s4 1985246804
    %v164 = vunpack.c.0.s8 %v163
    %v165 = vperm.slane %v152, %v164
    %v167 = vunpack.c.l.s4 839922192
    %v168 = vunpack.c.0.s8 %v167
    %v169 = vperm.slane %v155, %v168
    %v171 = vunpack.c.l.s4 1985246804
    %v172 = vunpack.c.0.s8 %v171
    %v173 = vperm.slane %v155, %v172
    %174 = vst [vmem:[#allocation1] ss:$2 sm:$0xff] %v161
    %s175 = scalar_lea.vmem [#allocation1], 1
    %176 = vst [vmem:[%s175] ss:$2 sm:$0xff] %v165
    %v177 = vld.sshfl [vmem:[#allocation1] sm:$0xff pattern:$0x75316420]
    %s178 = scalar_lea.vmem [#allocation1], 16
    %179 = vst [vmem:[%s178] ss:$2 sm:$0xff] %v169
    %s180 = scalar_lea.vmem [#allocation1], 17
    %181 = vst [vmem:[%s180] ss:$2 sm:$0xff] %v173
    %v182 = vld.sshfl [vmem:[#allocation1 + $0x10] sm:$0xff pattern:$0x75316420]
    %183 = vset.pattern.permute.xlu0 0
    %184 = vperm.xlu0 %183, %v177
    %v185 = vpop.permute.xlu0 %184
    %186 = vset.pattern.permute.xlu0 0
    %187 = vperm.xlu0 %186, %v182
    %v188 = vpop.permute.xlu0 %187
    %v189 = vlaneseq
    %v190 = vand.u32 %v189, 127
    %v191 = vperm.slane %v185, %v190
    %v192 = vperm.slane %v188, %v190
    %v193 = vsel %vm140, %v192, %v191
    %v195 = vmul.f32 %v19, %v193
    %v196 = vmul.f32 %v195, %v57
    %v197 = vsel %vm20, %v196, 0.0
    %198 = vadd.xlane.f32.xlu0 %v197
    %v199 = vpop.xlane.xlu0 %198
    %v200 = vrot.slane %v199, 4
    %v201 = vadd.f32 %v199, %v200
    %v202 = vrot.slane %v201, 2
    %v203 = vadd.f32 %v201, %v202
    %v204 = vrot.slane %v203, 1
    %v205 = vadd.f32 %v203, %v204
    %s206 = vtos %v205
    %s207 = scalar_lea.smem [#allocation2], 1
    %208 = sst [smem:[%s207]] %s206
    // Predicated region
    $region10: #{ae_loss_pallas.1} parent=1 // pred_check
      _
    $region11: #{ae_loss_pallas.1} parent=1 // pred_check_branch
      %210 = sbr.rel (0) target = $region13
    $region12: #{ae_loss_pallas.1} parent=1 // pred_region
      %212 = vsyncadd [#allocation3], 0
      %s214 = sshll.u32 %s2, 4
      %s215 = int_to_ptr.vmem [resolvable:$true] %s214
      %217 = dma.smem_to_vmem [#allocation2], 16, %s215, [#allocation3]
    $region13: #{ae_loss_pallas.1} parent=1 // pred_fallthru
      _
    // Predicated region
    $region14: #{ae_loss_pallas.1} parent=1 // pred_check
      _
    $region15: #{ae_loss_pallas.1} parent=1 // pred_check_branch
      %219 = sbr.rel (0) target = $region17
    $region16: #{ae_loss_pallas.1} parent=1 // pred_region
      %221 = dma.done [#allocation3], 16
    $region17: #{ae_loss_pallas.1} parent=1 // pred_fallthru
      _
    %222 = sfence
    %223 = vsyncpa [#allocation3], 1

</llo_original>
